<compile_context>
chip_gen: v7x
topology: tpu7x:2x2x1
jax: 0.10.0
libtpu: 0.0.40
codegen_flags: <defaults>
</compile_context>

<pallas_src>
import functools

import jax
import jax.numpy as jnp
from jax.experimental import pallas as pl
from jax.experimental.pallas import tpu as pltpu

BN_EPS = 1e-5


def _pick_tile(n, target, quantum):
    """Largest tile t <= target with t % quantum == 0 and n % t == 0; else full n."""
    if n % quantum != 0:
        return n
    t = (min(target, n) // quantum) * quantum
    while t >= quantum:
        if n % t == 0:
            return t
        t -= quantum
    return n


# ------------------------------ layer kernel -------------------------------


def _rgin_layer_kernel(x_col_ref, x_row_ref, adj_ref, wself_ref, bself_ref,
                       w1w_ref, b1_ref, w2s_ref, o_ref, acc_ref, *, apply_relu):
    """One R-GIN layer.  grid = (row tiles ["parallel"], source tiles ["arbitrary"]).

    Per output-row tile (BN folded into w1/b1, GIN eps=0 folded into adjacency):
      y     = x_src @ [w1_0 | ... | w1_{R-1}]          (wide projection)
      agg_r = (A_r + I)[rows, src_tile] @ y            (streamed + f32 accumulated)
      z_r   = relu(agg_r[:, r*Fo:(r+1)*Fo] + b1_r)
      out   = [z_0|...|z_{R-1}] @ vstack_r(w2_r) + x_row @ w_self + (b_self + sum_r b2_r)
    """
    k = pl.program_id(1)

    @pl.when(k == 0)
    def _init():
        acc_ref[...] = jnp.zeros_like(acc_ref)

    # Project the source-node tile into all relation hidden spaces at once.
    y = jnp.dot(x_col_ref[...], w1w_ref[...],
                preferred_element_type=jnp.float32)             # [tk, R*Fo] f32
    y = y.astype(x_col_ref.dtype)                               # bf16 for the MXU

    adj = adj_ref[...]                                          # [R, tm, tk] bf16
    num_r = adj.shape[0]
    for r in range(num_r):                                      # static, R small
        acc_ref[r, :, :] = acc_ref[r, :, :] + jnp.dot(
            adj[r], y, preferred_element_type=jnp.float32)      # [tm, R*Fo] f32

    @pl.when(k == pl.num_programs(1) - 1)
    def _finalize():
        f_out = w2s_ref.shape[1]
        zs = []
        for r in range(num_r):
            blk = acc_ref[r, :, r * f_out:(r + 1) * f_out] + b1_ref[r]   # [tm, Fo]
            zs.append(jnp.maximum(blk, 0.0).astype(x_row_ref.dtype))
        z_wide = jnp.concatenate(zs, axis=-1)                   # [tm, R*Fo] bf16
        out = jnp.dot(z_wide, w2s_ref[...], preferred_element_type=jnp.float32)
        out = out + jnp.dot(x_row_ref[...], wself_ref[...],
                            preferred_element_type=jnp.float32)
        out = out + bself_ref[...]
        if apply_relu:                  # inter-layer ReLU (Dropout identity in eval)
            out = jnp.maximum(out, 0.0)
        o_ref[...] = out


def _mean_pool_kernel(pool_ref, x_ref, o_ref):
    # TODO(synk): final [G, F_out] store is lane-narrow (masked vst); negligible here.
    o_ref[...] = jnp.dot(pool_ref[...], x_ref[...], preferred_element_type=jnp.float32)


# ------------------------------ host wrapper -------------------------------


def _fold_layer_params(p):
    """Fold eval-mode BatchNorm into w1/b1, per-relation b2 into the self bias, and
    pack weights for wide-lane MXU matmuls."""
    r, f_in, f_out = p["w1"].shape
    scale = p["gamma"] * jax.lax.rsqrt(p["var"] + BN_EPS)               # [R,1,Fo]
    w1f = p["w1"] * scale                                               # [R,Fin,Fo]
    b1f = (p["b1"] - p["mean"]) * scale + p["beta"]                     # [R,1,Fo]
    w1_wide = jnp.transpose(w1f, (1, 0, 2)).reshape(f_in, r * f_out)    # [Fin,R*Fo]
    w2_stack = p["w2"].reshape(r * f_out, f_out)                        # [R*Fo,Fo]
    b_total = p["b_self"] + jnp.sum(p["b2"], axis=0)                    # [1,Fo]
    return (p["w_self"].astype(jnp.bfloat16),
            b_total.astype(jnp.float32),
            w1_wide.astype(jnp.bfloat16),
            b1f.astype(jnp.float32),
            w2_stack.astype(jnp.bfloat16))


def _vmem_limit_bytes(r, tm, tk, f_in, f_out):
    bf16, f32 = 2, 4
    tiles = 2 * (r * tm * tk * bf16               # adjacency tile (double-buffered)
                 + (tm + tk) * f_in * bf16        # x row / source tiles
                 + tm * f_out * f32)              # resident output tile
    weights = (f_in * f_out + f_in * r * f_out + r * f_out * f_out) * bf16 \
        + (r + 2) * f_out * f32
    scratch = r * tm * r * f_out * f32
    total = tiles + 2 * weights + scratch + (8 << 20)       # generous headroom
    return int(min(max(total, 16 << 20), 64 << 20))          # <= 64 MiB (v7x physical)


def gnn_forward(x, adj, pool_mat, layer_params):
    """x: [N, F0] f32, adj: [R, N, N] edge counts (dst<-src), pool_mat: [G, N] f32."""
    num_layers = len(layer_params)
    num_relations, n, _ = adj.shape

    # Fold GIN's "+x" (eps=0) into the adjacency; small integer counts are exact in bf16.
    adj_b = (adj + jnp.eye(n, dtype=adj.dtype)[None]).astype(jnp.bfloat16)

    # Row tile (parallel / megacore-shardable) and source tile (streamed reduction).
    tm = _pick_tile(n, 256, 8)
    tk = _pick_tile(n, 512, 128)
    grid = (n // tm, n // tk)

    x_cur = x.astype(jnp.bfloat16)
    out = None
    for li, p in enumerate(layer_params):
        f_in = x_cur.shape[1]
        f_out = p["w_self"].shape[1]
        w_self, b_total, w1_wide, b1f, w2_stack = _fold_layer_params(p)

        kern = functools.partial(_rgin_layer_kernel,
                                 apply_relu=(li != num_layers - 1))
        out = pl.pallas_call(
            kern,
            grid=grid,
            in_specs=[
                pl.BlockSpec((tk, f_in), lambda i, k: (k, 0)),                # x (source tile)
                pl.BlockSpec((tm, f_in), lambda i, k: (i, 0)),                # x (row tile)
                pl.BlockSpec((num_relations, tm, tk),
                             lambda i, k: (0, i, k)),                         # adj tile
                pl.BlockSpec((f_in, f_out), lambda i, k: (0, 0)),             # w_self
                pl.BlockSpec((1, f_out), lambda i, k: (0, 0)),                # b_self + sum b2
                pl.BlockSpec((f_in, num_relations * f_out),
                             lambda i, k: (0, 0)),                            # w1 (wide)
                pl.BlockSpec((num_relations, 1, f_out),
                             lambda i, k: (0, 0, 0)),                         # b1 (folded)
                pl.BlockSpec((num_relations * f_out, f_out),
                             lambda i, k: (0, 0)),                            # w2 (stacked)
            ],
            out_specs=pl.BlockSpec((tm, f_out), lambda i, k: (i, 0)),
            out_shape=jax.ShapeDtypeStruct((n, f_out), jnp.float32),
            scratch_shapes=[pltpu.VMEM(
                (num_relations, tm, num_relations * f_out), jnp.float32)],
            compiler_params=pltpu.CompilerParams(
                dimension_semantics=("parallel", "arbitrary"),
                vmem_limit_bytes=_vmem_limit_bytes(
                    num_relations, tm, tk, f_in, f_out)),
        )(x_cur, x_cur, adj_b, w_self, b_total, w1_wide, b1f, w2_stack)
        x_cur = out.astype(jnp.bfloat16)      # tiny [N, F]; re-read as bf16 next layer

    # global_mean_pool as a matmul with the precomputed pooling matrix
    g = pool_mat.shape[0]
    f_out = out.shape[1]
    vm = pl.BlockSpec(memory_space=pltpu.MemorySpace.VMEM)
    return pl.pallas_call(
        _mean_pool_kernel,
        in_specs=[vm, vm],
        out_specs=vm,
        out_shape=jax.ShapeDtypeStruct((g, f_out), jnp.float32),
    )(pool_mat, out)


# ----------------------------- parameter setup -----------------------------


def _glorot(key, shape):
    fan_in, fan_out = shape[-2], shape[-1]
    lim = (6.0 / (fan_in + fan_out)) ** 0.5
    return jax.random.uniform(key, shape, jnp.float32, -lim, lim)


def init_rgin_layer(key, f_in, f_out, num_relations):
    ks = jax.random.split(key, 8)
    r = num_relations
    return {
        "w_self": _glorot(ks[0], (f_in, f_out)),
        "b_self": 0.01 * jax.random.normal(ks[1], (1, f_out), jnp.float32),
        "w1": _glorot(ks[2], (r, f_in, f_out)),
        "b1": 0.01 * jax.random.normal(ks[3], (r, 1, f_out), jnp.float32),
        "gamma": 1.0 + 0.05 * jax.random.normal(ks[4], (r, 1, f_out), jnp.float32),
        "beta": 0.05 * jax.random.normal(ks[5], (r, 1, f_out), jnp.float32),
        "mean": 0.1 * jax.random.normal(ks[6], (r, 1, f_out), jnp.float32),
        "var": 1.0 + 0.1 * jnp.abs(jax.random.normal(ks[7], (r, 1, f_out), jnp.float32)),
        "w2": _glorot(jax.random.fold_in(key, 100), (r, f_out, f_out)),
        "b2": 0.01 * jax.random.normal(jax.random.fold_in(key, 101), (r, 1, f_out), jnp.float32),
    }


# pure-JAX f32 reference of the original (unfused, unfolded) semantics
def gnn_forward_ref(x, adj, pool_mat, layer_params):
    num_layers = len(layer_params)
    r = adj.shape[0]
    for i, p in enumerate(layer_params):
        acc = x @ p["w_self"] + p["b_self"]
        for j in range(r):
            h = x + adj[j] @ x
            h = h @ p["w1"][j] + p["b1"][j]
            h = (h - p["mean"][j]) / jnp.sqrt(p["var"][j] + BN_EPS) * p["gamma"][j] + p["beta"][j]
            h = jnp.maximum(h, 0.0)
            h = h @ p["w2"][j] + p["b2"][j]
            acc = acc + h
        if i != num_layers - 1:
            acc = jnp.maximum(acc, 0.0)
        x = acc
    return pool_mat @ x


if __name__ == "__main__":
    key = jax.random.PRNGKey(0)

    # args: input_dim=8, hidden_layers=[16], output_dim=8, num_relations=2,
    #       dropout=0.5 (eval -> identity), last_layer_fa=False, layer_type='R-GIN'
    num_nodes, num_edges = 16, 40
    num_relations, num_graphs = 2, 2
    dims = [8, 16, 8]

    k_x, k_src, k_dst, k_rel, k_p = jax.random.split(key, 5)
    x = jax.random.normal(k_x, (num_nodes, dims[0]), jnp.float32)
    src = jax.random.randint(k_src, (num_edges,), 0, num_nodes)
    dst = jax.random.randint(k_dst, (num_edges,), 0, num_nodes)
    edge_index = jnp.stack([src, dst])                              # [2, E]
    edge_type = jax.random.randint(k_rel, (num_edges,), 0, num_relations)
    batch = jnp.repeat(jnp.arange(num_graphs), num_nodes // num_graphs)

    # glue: dense per-relation adjacency (scatter-add) and mean-pool matrix
    adj = jnp.zeros((num_relations, num_nodes, num_nodes), jnp.float32)
    adj = adj.at[edge_type, edge_index[1], edge_index[0]].add(1.0)  # [rel, dst, src]
    one_hot = (batch[None, :] == jnp.arange(num_graphs)[:, None]).astype(jnp.float32)
    pool_mat = one_hot / jnp.sum(one_hot, axis=1, keepdims=True)    # [G, N]

    layer_params = [
        init_rgin_layer(jax.random.fold_in(k_p, i), dims[i], dims[i + 1], num_relations)
        for i in range(len(dims) - 1)
    ]

    # TODO(synk): training-mode Dropout / BatchNorm batch-stats depend on torch RNG /
    # running-stat updates; inference-mode semantics are implemented instead.
    out = gnn_forward(x, adj, pool_mat, layer_params)
    out = jax.block_until_ready(out)

    ref = gnn_forward_ref(x, adj, pool_mat, layer_params)
    assert out.shape == (num_graphs, dims[-1])
    # tolerance reflects intentional bf16 inputs/weights (accumulation stays f32)
    assert jnp.allclose(out, ref, rtol=5e-2, atol=5e-2), "mismatch vs reference"
    print("KERNEL_OK")
</pallas_src>

<mosaic_0001>
module attributes {stable_mosaic.version = 11 : i64} {
  func.func @_rgin_layer_kernel(%arg0: i32, %arg1: i32, %arg2: memref<16x8xbf16, #tpu.memory_space<vmem>>, %arg3: memref<16x8xbf16, #tpu.memory_space<vmem>>, %arg4: memref<2x16x16xbf16, #tpu.memory_space<vmem>>, %arg5: memref<8x16xbf16, #tpu.memory_space<vmem>>, %arg6: memref<1x16xf32, #tpu.memory_space<vmem>>, %arg7: memref<8x32xbf16, #tpu.memory_space<vmem>>, %arg8: memref<2x1x16xf32, #tpu.memory_space<vmem>>, %arg9: memref<32x16xbf16, #tpu.memory_space<vmem>>, %arg10: memref<16x16xf32, #tpu.memory_space<vmem>>, %arg11: memref<2x16x32xf32, #tpu.memory_space<vmem>>) attributes {dimension_semantics = [#tpu.dimension_semantics<parallel>, #tpu.dimension_semantics<arbitrary>], iteration_bounds = array<i64: 1, 1>, scalar_prefetch = 0 : i64, scratch_operands = 1 : i64, tpu.core_type = #tpu.core_type<tc>, window_params = [{transform_indices = @transform_0, window_bounds = array<i64: 16, 8>}, {transform_indices = @transform_1, window_bounds = array<i64: 16, 8>}, {transform_indices = @transform_2, window_bounds = array<i64: 2, 16, 16>}, {pipeline_mode = #tpu.pipeline_mode<synchronous>, transform_indices = @transform_3, window_bounds = array<i64: 8, 16>}, {pipeline_mode = #tpu.pipeline_mode<synchronous>, transform_indices = @transform_4, window_bounds = array<i64: 1, 16>}, {pipeline_mode = #tpu.pipeline_mode<synchronous>, transform_indices = @transform_5, window_bounds = array<i64: 8, 32>}, {pipeline_mode = #tpu.pipeline_mode<synchronous>, transform_indices = @transform_6, window_bounds = array<i64: 2, 1, 16>}, {pipeline_mode = #tpu.pipeline_mode<synchronous>, transform_indices = @transform_7, window_bounds = array<i64: 32, 16>}, {transform_indices = @transform_8, window_bounds = array<i64: 16, 16>}]} {
    %c0_i32 = arith.constant 0 : i32
    %0 = arith.cmpi eq, %arg1, %c0_i32 : i32
    %1 = arith.extui %0 : i1 to i32
    %c0_i32_0 = arith.constant 0 : i32
    %2 = arith.cmpi ne, %1, %c0_i32_0 : i32
    scf.if %2 {
      %cst_22 = arith.constant 0.000000e+00 : f32
      %29 = vector.broadcast %cst_22 : f32 to vector<2x16x32xf32>
      %c0_23 = arith.constant 0 : index
      %c0_24 = arith.constant 0 : index
      %c0_25 = arith.constant 0 : index
      %30 = vector.load %arg11[%c0_23, %c0_24, %c0_25] : memref<2x16x32xf32, #tpu.memory_space<vmem>>, vector<2x16x32xf32>
      tpu.vector_store %arg11[%c0_23, %c0_24, %c0_25], %29 {strides = array<i32>} : memref<2x16x32xf32, #tpu.memory_space<vmem>>, vector<2x16x32xf32>,
    } else {
    }
    %c0 = arith.constant 0 : index
    %c0_1 = arith.constant 0 : index
    %3 = vector.load %arg2[%c0, %c0_1] : memref<16x8xbf16, #tpu.memory_space<vmem>>, vector<16x8xbf16>
    %c0_2 = arith.constant 0 : index
    %c0_3 = arith.constant 0 : index
    %4 = vector.load %arg7[%c0_2, %c0_3] : memref<8x32xbf16, #tpu.memory_space<vmem>>, vector<8x32xbf16>
    %cst = arith.constant dense<0.000000e+00> : vector<16x32xf32>
    %5 = tpu.matmul %3, %4, %cst {dimension_numbers = #tpu.dot_dimension_numbers<[1], [0], [0], [1], [0, 0, 1, 1], [], []>} : vector<16x8xbf16>, vector<8x32xbf16>, vector<16x32xf32> -> vector<16x32xf32>
    %6 = arith.truncf %5 : vector<16x32xf32> to vector<16x32xbf16>
    %c0_4 = arith.constant 0 : index
    %c0_5 = arith.constant 0 : index
    %c0_6 = arith.constant 0 : index
    %7 = vector.load %arg4[%c0_4, %c0_5, %c0_6] : memref<2x16x16xbf16, #tpu.memory_space<vmem>>, vector<2x16x16xbf16>
    %c0_7 = arith.constant 0 : index
    %c0_8 = arith.constant 0 : index
    %c0_9 = arith.constant 0 : index
    %8 = vector.load %arg11[%c0_7, %c0_8, %c0_9] : memref<2x16x32xf32, #tpu.memory_space<vmem>>, vector<1x16x32xf32>
    %9 = vector.shape_cast %8 : vector<1x16x32xf32> to vector<16x32xf32>
    %10 = vector.extract_strided_slice %7 {offsets = [0, 0, 0], sizes = [1, 16, 16], strides = [1, 1, 1]} : vector<2x16x16xbf16> to vector<1x16x16xbf16>
    %11 = vector.shape_cast %10 : vector<1x16x16xbf16> to vector<16x16xbf16>
    %cst_10 = arith.constant dense<0.000000e+00> : vector<16x32xf32>
    %12 = tpu.matmul %11, %6, %cst_10 {dimension_numbers = #tpu.dot_dimension_numbers<[1], [0], [0], [1], [0, 0, 1, 1], [], []>} : vector<16x16xbf16>, vector<16x32xbf16>, vector<16x32xf32> -> vector<16x32xf32>
    %13 = arith.addf %9, %12 : vector<16x32xf32>
    %c0_11 = arith.constant 0 : index
    %c0_12 = arith.constant 0 : index
    %c0_13 = arith.constant 0 : index
    %14 = vector.load %arg11[%c0_11, %c0_12, %c0_13] : memref<2x16x32xf32, #tpu.memory_space<vmem>>, vector<1x16x32xf32>
    %15 = vector.shape_cast %14 : vector<1x16x32xf32> to vector<16x32xf32>
    %16 = vector.shape_cast %13 : vector<16x32xf32> to vector<1x16x32xf32>
    tpu.vector_store %arg11[%c0_11, %c0_12, %c0_13], %16 {strides = array<i32>} : memref<2x16x32xf32, #tpu.memory_space<vmem>>, vector<1x16x32xf32>,
    %c1 = arith.constant 1 : index
    %c0_14 = arith.constant 0 : index
    %c0_15 = arith.constant 0 : index
    %17 = vector.load %arg11[%c1, %c0_14, %c0_15] : memref<2x16x32xf32, #tpu.memory_space<vmem>>, vector<1x16x32xf32>
    %18 = vector.shape_cast %17 : vector<1x16x32xf32> to vector<16x32xf32>
    %19 = vector.extract_strided_slice %7 {offsets = [1, 0, 0], sizes = [1, 16, 16], strides = [1, 1, 1]} : vector<2x16x16xbf16> to vector<1x16x16xbf16>
    %20 = vector.shape_cast %19 : vector<1x16x16xbf16> to vector<16x16xbf16>
    %cst_16 = arith.constant dense<0.000000e+00> : vector<16x32xf32>
    %21 = tpu.matmul %20, %6, %cst_16 {dimension_numbers = #tpu.dot_dimension_numbers<[1], [0], [0], [1], [0, 0, 1, 1], [], []>} : vector<16x16xbf16>, vector<16x32xbf16>, vector<16x32xf32> -> vector<16x32xf32>
    %22 = arith.addf %18, %21 : vector<16x32xf32>
    %c1_17 = arith.constant 1 : index
    %c0_18 = arith.constant 0 : index
    %c0_19 = arith.constant 0 : index
    %23 = vector.load %arg11[%c1_17, %c0_18, %c0_19] : memref<2x16x32xf32, #tpu.memory_space<vmem>>, vector<1x16x32xf32>
    %24 = vector.shape_cast %23 : vector<1x16x32xf32> to vector<16x32xf32>
    %25 = vector.shape_cast %22 : vector<16x32xf32> to vector<1x16x32xf32>
    tpu.vector_store %arg11[%c1_17, %c0_18, %c0_19], %25 {strides = array<i32>} : memref<2x16x32xf32, #tpu.memory_space<vmem>>, vector<1x16x32xf32>,
    %c0_i32_20 = arith.constant 0 : i32
    %26 = arith.cmpi eq, %arg1, %c0_i32_20 : i32
    %27 = arith.extui %26 : i1 to i32
    %c0_i32_21 = arith.constant 0 : i32
    %28 = arith.cmpi ne, %27, %c0_i32_21 : i32
    scf.if %28 {
      %c0_22 = arith.constant 0 : index
      %c0_23 = arith.constant 0 : index
      %c0_24 = arith.constant 0 : index
      %29 = vector.load %arg11[%c0_22, %c0_23, %c0_24] : memref<2x16x32xf32, #tpu.memory_space<vmem>>, vector<1x16x16xf32>
      %30 = vector.shape_cast %29 : vector<1x16x16xf32> to vector<16x16xf32>
      %c0_25 = arith.constant 0 : index
      %c0_26 = arith.constant 0 : index
      %c0_27 = arith.constant 0 : index
      %31 = vector.load %arg8[%c0_25, %c0_26, %c0_27] : memref<2x1x16xf32, #tpu.memory_space<vmem>>, vector<1x1x16xf32>
      %32 = vector.shape_cast %31 : vector<1x1x16xf32> to vector<1x16xf32>
      %33 = vector.broadcast %32 : vector<1x16xf32> to vector<16x16xf32>
      %34 = arith.addf %30, %33 : vector<16x16xf32>
      %cst_28 = arith.constant 0.000000e+00 : f32
      %35 = vector.broadcast %cst_28 : f32 to vector<16x16xf32>
      %36 = arith.maximumf %34, %35 : vector<16x16xf32>
      %37 = arith.truncf %36 : vector<16x16xf32> to vector<16x16xbf16>
      %c1_29 = arith.constant 1 : index
      %c0_30 = arith.constant 0 : index
      %c16 = arith.constant 16 : index
      %38 = vector.load %arg11[%c1_29, %c0_30, %c16] : memref<2x16x32xf32, #tpu.memory_space<vmem>>, vector<1x16x16xf32>
      %39 = vector.shape_cast %38 : vector<1x16x16xf32> to vector<16x16xf32>
      %c1_31 = arith.constant 1 : index
      %c0_32 = arith.constant 0 : index
      %c0_33 = arith.constant 0 : index
      %40 = vector.load %arg8[%c1_31, %c0_32, %c0_33] : memref<2x1x16xf32, #tpu.memory_space<vmem>>, vector<1x1x16xf32>
      %41 = vector.shape_cast %40 : vector<1x1x16xf32> to vector<1x16xf32>
      %42 = vector.broadcast %41 : vector<1x16xf32> to vector<16x16xf32>
      %43 = arith.addf %39, %42 : vector<16x16xf32>
      %cst_34 = arith.constant 0.000000e+00 : f32
      %44 = vector.broadcast %cst_34 : f32 to vector<16x16xf32>
      %45 = arith.maximumf %43, %44 : vector<16x16xf32>
      %46 = arith.truncf %45 : vector<16x16xf32> to vector<16x16xbf16>
      %47 = tpu.concatenate %37, %46 in 1 : vector<16x16xbf16>, vector<16x16xbf16> -> vector<16x32xbf16>
      %c0_35 = arith.constant 0 : index
      %c0_36 = arith.constant 0 : index
      %48 = vector.load %arg9[%c0_35, %c0_36] : memref<32x16xbf16, #tpu.memory_space<vmem>>, vector<32x16xbf16>
      %cst_37 = arith.constant dense<0.000000e+00> : vector<16x16xf32>
      %49 = tpu.matmul %47, %48, %cst_37 {dimension_numbers = #tpu.dot_dimension_numbers<[1], [0], [0], [1], [0, 0, 1, 1], [], []>} : vector<16x32xbf16>, vector<32x16xbf16>, vector<16x16xf32> -> vector<16x16xf32>
      %c0_38 = arith.constant 0 : index
      %c0_39 = arith.constant 0 : index
      %50 = vector.load %arg3[%c0_38, %c0_39] : memref<16x8xbf16, #tpu.memory_space<vmem>>, vector<16x8xbf16>
      %c0_40 = arith.constant 0 : index
      %c0_41 = arith.constant 0 : index
      %51 = vector.load %arg5[%c0_40, %c0_41] : memref<8x16xbf16, #tpu.memory_space<vmem>>, vector<8x16xbf16>
      %cst_42 = arith.constant dense<0.000000e+00> : vector<16x16xf32>
      %52 = tpu.matmul %50, %51, %cst_42 {dimension_numbers = #tpu.dot_dimension_numbers<[1], [0], [0], [1], [0, 0, 1, 1], [], []>} : vector<16x8xbf16>, vector<8x16xbf16>, vector<16x16xf32> -> vector<16x16xf32>
      %53 = arith.addf %49, %52 : vector<16x16xf32>
      %c0_43 = arith.constant 0 : index
      %c0_44 = arith.constant 0 : index
      %54 = vector.load %arg6[%c0_43, %c0_44] : memref<1x16xf32, #tpu.memory_space<vmem>>, vector<1x16xf32>
      %55 = vector.broadcast %54 : vector<1x16xf32> to vector<16x16xf32>
      %56 = arith.addf %53, %55 : vector<16x16xf32>
      %cst_45 = arith.constant 0.000000e+00 : f32
      %57 = vector.broadcast %cst_45 : f32 to vector<16x16xf32>
      %58 = arith.maximumf %56, %57 : vector<16x16xf32>
      %c0_46 = arith.constant 0 : index
      %c0_47 = arith.constant 0 : index
      %59 = vector.load %arg10[%c0_46, %c0_47] : memref<16x16xf32, #tpu.memory_space<vmem>>, vector<16x16xf32>
      tpu.vector_store %arg10[%c0_46, %c0_47], %58 {strides = array<i32>} : memref<16x16xf32, #tpu.memory_space<vmem>>, vector<16x16xf32>,
    } else {
    }
    return
  }
  func.func @transform_0(%arg0: i32, %arg1: i32) -> (i32, i32) {
    %c0_i32 = arith.constant 0 : i32
    %c0_i32_0 = arith.constant 0 : i32
    return %arg1, %c0_i32 : i32, i32
  }
  func.func @transform_1(%arg0: i32, %arg1: i32) -> (i32, i32) {
    %c0_i32 = arith.constant 0 : i32
    %c0_i32_0 = arith.constant 0 : i32
    return %arg0, %c0_i32 : i32, i32
  }
  func.func @transform_2(%arg0: i32, %arg1: i32) -> (i32, i32, i32) {
    %c0_i32 = arith.constant 0 : i32
    %c0_i32_0 = arith.constant 0 : i32
    return %c0_i32, %arg0, %arg1 : i32, i32, i32
  }
  func.func @transform_3(%arg0: i32, %arg1: i32) -> (i32, i32) {
    %c0_i32 = arith.constant 0 : i32
    %c0_i32_0 = arith.constant 0 : i32
    %c0_i32_1 = arith.constant 0 : i32
    return %c0_i32, %c0_i32_0 : i32, i32
  }
  func.func @transform_4(%arg0: i32, %arg1: i32) -> (i32, i32) {
    %c0_i32 = arith.constant 0 : i32
    %c0_i32_0 = arith.constant 0 : i32
    %c0_i32_1 = arith.constant 0 : i32
    return %c0_i32, %c0_i32_0 : i32, i32
  }
  func.func @transform_5(%arg0: i32, %arg1: i32) -> (i32, i32) {
    %c0_i32 = arith.constant 0 : i32
    %c0_i32_0 = arith.constant 0 : i32
    %c0_i32_1 = arith.constant 0 : i32
    return %c0_i32, %c0_i32_0 : i32, i32
  }
  func.func @transform_6(%arg0: i32, %arg1: i32) -> (i32, i32, i32) {
    %c0_i32 = arith.constant 0 : i32
    %c0_i32_0 = arith.constant 0 : i32
    %c0_i32_1 = arith.constant 0 : i32
    %c0_i32_2 = arith.constant 0 : i32
    return %c0_i32, %c0_i32_0, %c0_i32_1 : i32, i32, i32
  }
  func.func @transform_7(%arg0: i32, %arg1: i32) -> (i32, i32) {
    %c0_i32 = arith.constant 0 : i32
    %c0_i32_0 = arith.constant 0 : i32
    %c0_i32_1 = arith.constant 0 : i32
    return %c0_i32, %c0_i32_0 : i32, i32
  }
  func.func @transform_8(%arg0: i32, %arg1: i32) -> (i32, i32) {
    %c0_i32 = arith.constant 0 : i32
    %c0_i32_0 = arith.constant 0 : i32
    return %arg0, %c0_i32 : i32, i32
  }
}

</mosaic_0001>

<llo_original>
// kernel: tpu_custom_call.1
$region0: #{tpu_custom_call.1}
  #allocation0 [shape = 'u32[]', space=smem, size = 0x4, offset = 0x4, fixed_abs, tag = 'smem constant byte address 0x4 - core index']
  #allocation1 [shape = 'u32[144,128]{1,0:T(1,128)}', space=vmem, size = 0x12000, scoped, tag = 'internal scratch']
  #allocation2 [shape = 'f32[2,16,32]{2,1,0:T(8,128)}', space=vmem, size = 0x4000, scoped, tag = 'scratch operand']
  %s0 = inlined_call_operand.vmem [shape: bf16[16,8], index: 0, kind: input, shape index: {}]
  %s1 = inlined_call_operand.vmem [shape: bf16[16,8], index: 1, kind: input, shape index: {}]
  %s2 = inlined_call_operand.vmem [shape: bf16[2,16,16], index: 2, kind: input, shape index: {}]
  %s3 = inlined_call_operand.vmem [shape: bf16[8,16], index: 3, kind: input, shape index: {}]
  %s4 = inlined_call_operand.vmem [shape: f32[1,16], index: 4, kind: input, shape index: {}]
  %s5 = inlined_call_operand.vmem [shape: bf16[8,32], index: 5, kind: input, shape index: {}]
  %s6 = inlined_call_operand.vmem [shape: f32[2,1,16], index: 6, kind: input, shape index: {}]
  %s7 = inlined_call_operand.vmem [shape: bf16[32,16], index: 7, kind: input, shape index: {}]
  %s8 = inlined_call_operand.hbm [shape: f32[16,16], index: 8, kind: output, shape index: {}]
  %s9 = sld [smem:[#allocation0]]
  $region50: #{tpu_custom_call.1} parent=0
    _
  %s11 = ssub.s32 1, %s9
  %s12 = scalar_select 0, %s11, %s9
  $region1: #{tpu_custom_call.1} parent=0
    #allocation3 [shape = 'u8[8192]{0}', space=vmem, size = 0x2000, scoped, tag = 'output window, operand 0, single buffered']
    #allocation4 [shape = 's32[1]{0}', space=sflag, size = 0x4, scoped, tag = 'scoped memory for tpu_custom_call.1']
    %13 = vsyncpa [#allocation4], 0
    // Predicated region
    $region2: #{tpu_custom_call.1} parent=1 // pred_check
      _
    $region3: #{tpu_custom_call.1} parent=1 // pred_check_branch
      %15 = sbr.rel (0) target = $region5
    $region4: #{tpu_custom_call.1} parent=1 // pred_region
      _
    $region5: #{tpu_custom_call.1} parent=1 // pred_fallthru
      _
    // Predicated region
    $region6: #{tpu_custom_call.1} parent=1 // pred_check
      _
    $region7: #{tpu_custom_call.1} parent=1 // pred_check_branch
      %17 = sbr.rel (0) target = $region9
    $region8: #{tpu_custom_call.1} parent=1 // pred_region
      _
    $region9: #{tpu_custom_call.1} parent=1 // pred_fallthru
      _
    // Predicated region
    $region10: #{tpu_custom_call.1} parent=1 // pred_check
      _
    $region11: #{tpu_custom_call.1} parent=1 // pred_check_branch
      %19 = sbr.rel (0) target = $region13
    $region12: #{tpu_custom_call.1} parent=1 // pred_region
      _
    $region13: #{tpu_custom_call.1} parent=1 // pred_fallthru
      _
    // Predicated region
    $region14: #{tpu_custom_call.1} parent=1 // pred_check
      _
    $region15: #{tpu_custom_call.1} parent=1 // pred_check_branch
      %21 = sbr.rel (0) target = $region17
    $region16: #{tpu_custom_call.1} parent=1 // pred_region
      _
    $region17: #{tpu_custom_call.1} parent=1 // pred_fallthru
      _
    // Predicated region
    $region18: #{tpu_custom_call.1} parent=1 // pred_check
      _
    $region19: #{tpu_custom_call.1} parent=1 // pred_check_branch
      %23 = sbr.rel (0) target = $region21
    $region20: #{tpu_custom_call.1} parent=1 // pred_region
      _
    $region21: #{tpu_custom_call.1} parent=1 // pred_fallthru
      _
    // Predicated region
    $region22: #{tpu_custom_call.1} parent=1 // pred_check
      _
    $region23: #{tpu_custom_call.1} parent=1 // pred_check_branch
      %25 = sbr.rel (0) target = $region25
    $region24: #{tpu_custom_call.1} parent=1 // pred_region
      _
    $region25: #{tpu_custom_call.1} parent=1 // pred_fallthru
      _
    // Predicated region
    $region26: #{tpu_custom_call.1} parent=1 // pred_check
      _
    $region27: #{tpu_custom_call.1} parent=1 // pred_check_branch
      %27 = sbr.rel (0) target = $region29
    $region28: #{tpu_custom_call.1} parent=1 // pred_region
      _
    $region29: #{tpu_custom_call.1} parent=1 // pred_fallthru
      _
    // Predicated region
    $region30: #{tpu_custom_call.1} parent=1 // pred_check
      _
    $region31: #{tpu_custom_call.1} parent=1 // pred_check_branch
      %29 = sbr.rel (0) target = $region33
    $region32: #{tpu_custom_call.1} parent=1 // pred_region
      _
    $region33: #{tpu_custom_call.1} parent=1 // pred_fallthru
      _
    %p31 = scmp.eq.s32.totalorder 0, 0
    // Predicated region
    $region34: #{tpu_custom_call.1} parent=1 // pred_check
      %p32 = pneg %p31
    $region35: #{tpu_custom_call.1} parent=1 // pred_check_branch
      %34 = sbr.rel (%p32) target = $region37
    $region36: #{tpu_custom_call.1} parent=1 // pred_region
      %vm35 = vcmask 261120
      %36 = vst.msk [vmem:[#allocation2] sm:$0xff] %vm35, 0.0
      %37 = vst.msk [vmem:[#allocation2 + $0x8] sm:$0xff] %vm35, 0.0
      %38 = vst.msk [vmem:[#allocation2 + $0x10] sm:$0xff] %vm35, 0.0
      %39 = vst.msk [vmem:[#allocation2 + $0x18] sm:$0xff] %vm35, 0.0
    $region37: #{tpu_custom_call.1} parent=1 // pred_fallthru
      _
    %v40 = vld [vmem:[%s0] sm:$0xf]
    %v41 = vld [vmem:[%s0 + $0x4] sm:$0xf]
    %v42 = vld [vmem:[%s5] sm:$0xf]
    %v45 = vunpack.c.l.b16 %v40
    %v46 = vunpack.c.l.b16 %v41
    %v47 = vpack.c.b16 %v46, %v45
    %vm48 = vcmask 64512
    %v50 = vsel %vm48, %v47, 0
    %vm52 = vcmask 1043456
    %v54 = vsel %vm52, %v42, 0
    %56 = vmatprep.subr.bf16.mxu0 0
    %57 = vmatpush1.bf16.msra.mxu0 %v54
    %58 = vmatprep.subr.bf16.mxu0 0
    %59 = vmatpush1.bf16.msra.mxu0 0
    %60 = vmatprep.subr.bf16.mxu0 0
    %61 = vmatpush1.bf16.msra.mxu0 0
    %62 = vmatprep.subr.bf16.mxu0 0
    %63 = vmatpush1.bf16.msra.mxu0 0
    %64 = vmatprep.subr.bf16.mxu0 0
    %65 = vmatpush1.bf16.msra.mxu0 0
    %66 = vmatprep.subr.bf16.mxu0 0
    %67 = vmatpush1.bf16.msra.mxu0 0
    %68 = vmatprep.subr.bf16.mxu0 0
    %69 = vmatpush1.bf16.msra.mxu0 0
    %70 = vmatprep.subr.bf16.mxu0 0
    %71 = vmatpush1.bf16.msra.mxu0 0
    %72 = vmatprep.subr.bf16.mxu0 0
    %73 = vmatpush1.bf16.msra.mxu0 0
    %74 = vmatprep.subr.bf16.mxu0 0
    %75 = vmatpush1.bf16.msra.mxu0 0
    %76 = vmatprep.subr.bf16.mxu0 0
    %77 = vmatpush1.bf16.msra.mxu0 0
    %78 = vmatprep.subr.bf16.mxu0 0
    %79 = vmatpush1.bf16.msra.mxu0 0
    %80 = vmatprep.subr.bf16.mxu0 0
    %81 = vmatpush1.bf16.msra.mxu0 0
    %82 = vmatprep.subr.bf16.mxu0 0
    %83 = vmatpush1.bf16.msra.mxu0 0
    %84 = vmatprep.subr.bf16.mxu0 0
    %85 = vmatpush1.bf16.msra.mxu0 0
    %86 = vmatprep.subr.bf16.mxu0 0
    %87 = vmatpush1.bf16.msra.mxu0 0
    %88 = vmatprep.mubr.bf16.mxu0 0
    %89 = vmatmul.mubr.bf16.gmra.mrb[0].mxu0 %v50
    %v90 = vpop.f32.mrb[0].mxu0
    %v91 = vadd.f32 0.0, %v90
    %v92 = vpop.f32.mrb[0].mxu0
    %v93 = vpop.f32.mrb[0].mxu0
    %v94 = vadd.f32 0.0, %v93
    %v95 = vpop.f32.mrb[0].mxu0
    %96 = vdwg.mxu0
    %v97 = vpack.c.bf16 %v94, %v91
    %v98 = vld [vmem:[%s2] sm:$0xf]
    %v99 = vld [vmem:[%s2 + $0x4] sm:$0xf]
    %v100 = vld [vmem:[%s2 + $0x8] sm:$0xf]
    %v101 = vld [vmem:[%s2 + $0xc] sm:$0xf]
    %v102 = vld [vmem:[#allocation2] sm:$0xff]
    %v103 = vld [vmem:[#allocation2 + $0x8] sm:$0xff]
    %v106 = vunpack.c.l.b16 %v98
    %v107 = vunpack.c.l.b16 %v99
    %v108 = vpack.c.b16 %v107, %v106
    %vm109 = vcmask 130048
    %v111 = vsel %vm109, %v108, 0
    %113 = vmatprep.subr.bf16.mxu0 0
    %114 = vmatpush1.bf16.msra.mxu0 %v97
    %115 = vmatprep.subr.bf16.mxu0 0
    %116 = vmatpush1.bf16.msra.mxu0 0
    %117 = vmatprep.subr.bf16.mxu0 0
    %118 = vmatpush1.bf16.msra.mxu0 0
    %119 = vmatprep.subr.bf16.mxu0 0
    %120 = vmatpush1.bf16.msra.mxu0 0
    %121 = vmatprep.subr.bf16.mxu0 0
    %122 = vmatpush1.bf16.msra.mxu0 0
    %123 = vmatprep.subr.bf16.mxu0 0
    %124 = vmatpush1.bf16.msra.mxu0 0
    %125 = vmatprep.subr.bf16.mxu0 0
    %126 = vmatpush1.bf16.msra.mxu0 0
    %127 = vmatprep.subr.bf16.mxu0 0
    %128 = vmatpush1.bf16.msra.mxu0 0
    %129 = vmatprep.subr.bf16.mxu0 0
    %130 = vmatpush1.bf16.msra.mxu0 0
    %131 = vmatprep.subr.bf16.mxu0 0
    %132 = vmatpush1.bf16.msra.mxu0 0
    %133 = vmatprep.subr.bf16.mxu0 0
    %134 = vmatpush1.bf16.msra.mxu0 0
    %135 = vmatprep.subr.bf16.mxu0 0
    %136 = vmatpush1.bf16.msra.mxu0 0
    %137 = vmatprep.subr.bf16.mxu0 0
    %138 = vmatpush1.bf16.msra.mxu0 0
    %139 = vmatprep.subr.bf16.mxu0 0
    %140 = vmatpush1.bf16.msra.mxu0 0
    %141 = vmatprep.subr.bf16.mxu0 0
    %142 = vmatpush1.bf16.msra.mxu0 0
    %143 = vmatprep.subr.bf16.mxu0 0
    %144 = vmatpush1.bf16.msra.mxu0 0
    %145 = vmatprep.mubr.bf16.mxu0 0
    %146 = vmatmul.mubr.bf16.gmra.mrb[0].mxu0 %v111
    %v147 = vpop.f32.mrb[0].mxu0
    %v148 = vadd.f32 0.0, %v147
    %v149 = vpop.f32.mrb[0].mxu0
    %v150 = vpop.f32.mrb[0].mxu0
    %v151 = vadd.f32 0.0, %v150
    %v152 = vpop.f32.mrb[0].mxu0
    %153 = vdwg.mxu0
    %v154 = vadd.f32 %v102, %v148
    %v155 = vadd.f32 %v103, %v151
    %vm156 = vcmask 261120
    %157 = vst.msk [vmem:[#allocation2] sm:$0xff] %vm156, %v154
    %158 = vst.msk [vmem:[#allocation2 + $0x8] sm:$0xff] %vm156, %v155
    %s159 = scalar_lea.vmem [#allocation2], 16
    %v160 = vld [vmem:[%s159] sm:$0xff]
    %v161 = vld [vmem:[%s159 + $0x8] sm:$0xff]
    %v164 = vunpack.c.l.b16 %v100
    %v165 = vunpack.c.l.b16 %v101
    %v166 = vpack.c.b16 %v165, %v164
    %v168 = vsel %vm109, %v166, 0
    %170 = vmatprep.subr.bf16.mxu0 0
    %171 = vmatpush1.bf16.msra.mxu0 %v97
    %172 = vmatprep.subr.bf16.mxu0 0
    %173 = vmatpush1.bf16.msra.mxu0 0
    %174 = vmatprep.subr.bf16.mxu0 0
    %175 = vmatpush1.bf16.msra.mxu0 0
    %176 = vmatprep.subr.bf16.mxu0 0
    %177 = vmatpush1.bf16.msra.mxu0 0
    %178 = vmatprep.subr.bf16.mxu0 0
    %179 = vmatpush1.bf16.msra.mxu0 0
    %180 = vmatprep.subr.bf16.mxu0 0
    %181 = vmatpush1.bf16.msra.mxu0 0
    %182 = vmatprep.subr.bf16.mxu0 0
    %183 = vmatpush1.bf16.msra.mxu0 0
    %184 = vmatprep.subr.bf16.mxu0 0
    %185 = vmatpush1.bf16.msra.mxu0 0
    %186 = vmatprep.subr.bf16.mxu0 0
    %187 = vmatpush1.bf16.msra.mxu0 0
    %188 = vmatprep.subr.bf16.mxu0 0
    %189 = vmatpush1.bf16.msra.mxu0 0
    %190 = vmatprep.subr.bf16.mxu0 0
    %191 = vmatpush1.bf16.msra.mxu0 0
    %192 = vmatprep.subr.bf16.mxu0 0
    %193 = vmatpush1.bf16.msra.mxu0 0
    %194 = vmatprep.subr.bf16.mxu0 0
    %195 = vmatpush1.bf16.msra.mxu0 0
    %196 = vmatprep.subr.bf16.mxu0 0
    %197 = vmatpush1.bf16.msra.mxu0 0
    %198 = vmatprep.subr.bf16.mxu0 0
    %199 = vmatpush1.bf16.msra.mxu0 0
    %200 = vmatprep.subr.bf16.mxu0 0
    %201 = vmatpush1.bf16.msra.mxu0 0
    %202 = vmatprep.mubr.bf16.mxu0 0
    %203 = vmatmul.mubr.bf16.gmra.mrb[0].mxu0 %v168
    %v204 = vpop.f32.mrb[0].mxu0
    %v205 = vadd.f32 0.0, %v204
    %v206 = vpop.f32.mrb[0].mxu0
    %v207 = vpop.f32.mrb[0].mxu0
    %v208 = vadd.f32 0.0, %v207
    %v209 = vpop.f32.mrb[0].mxu0
    %210 = vdwg.mxu0
    %v211 = vadd.f32 %v160, %v205
    %v212 = vadd.f32 %v161, %v208
    %213 = vst.msk [vmem:[%s159] sm:$0xff] %vm156, %v211
    %214 = vst.msk [vmem:[%s159 + $0x8] sm:$0xff] %vm156, %v212
    // Predicated region
    $region38: #{tpu_custom_call.1} parent=1 // pred_check
      %p215 = pneg %p31
    $region39: #{tpu_custom_call.1} parent=1 // pred_check_branch
      %217 = sbr.rel (%p215) target = $region41
    $region40: #{tpu_custom_call.1} parent=1 // pred_region
      %v218 = vld [vmem:[#allocation2] sm:$0xff]
      %v219 = vld [vmem:[#allocation2 + $0x8] sm:$0xff]
      %v220 = vld [vmem:[%s6] sm:$0x1]
      %v222 = vlaneseq
      %v223 = vshrl.u32 %v222, 7
      %v224 = vsub.s32 0, %v223
      %v225 = vrot.slane %v220, %v224
      %v227 = vadd.f32 %v218, %v225
      %v228 = vadd.f32 %v219, %v225
      %v229 = vmax.f32 %v227, 0.0
      %v230 = vmax.f32 %v228, 0.0
      %v231 = vpack.c.bf16 %v230, %v229
      %v232 = vld [vmem:[%s159] sm:$0xff]
      %v233 = vld [vmem:[%s159 + $0x8] sm:$0xff]
      %s234 = scalar_lea.vmem %s6, 1
      %v235 = vld [vmem:[%s234] sm:$0x1]
      %v237 = vlaneseq
      %v238 = vshrl.u32 %v237, 7
      %v239 = vsub.s32 0, %v238
      %v240 = vrot.slane %v235, %v239
      %241 = vrot.lane.b32.xlu0 %v240, 16
      %v242 = vpop.permute.xlu0 %241
      %v244 = vadd.f32 %v232, %v242
      %v245 = vadd.f32 %v233, %v242
      %v246 = vmax.f32 %v244, 0.0
      %v247 = vmax.f32 %v245, 0.0
      %v248 = vpack.c.bf16 %v247, %v246
      %v251 = vsel %vm109, %v231, %v248
      %v252 = vld [vmem:[%s7] sm:$0xf]
      %v253 = vld [vmem:[%s7 + $0x4] sm:$0xf]
      %v254 = vld [vmem:[%s7 + $0x8] sm:$0xf]
      %v255 = vld [vmem:[%s7 + $0xc] sm:$0xf]
      %v256 = vld [vmem:[%s1] sm:$0xf]
      %v257 = vld [vmem:[%s1 + $0x4] sm:$0xf]
      %v258 = vld [vmem:[%s3] sm:$0xf]
      %v261 = vunpack.c.l.b16 %v256
      %v262 = vunpack.c.l.b16 %v257
      %v263 = vpack.c.b16 %v262, %v261
      %v265 = vsel %vm48, %v263, 0
      %v268 = vsel %vm52, %v258, 0
      %270 = vmatprep.subr.bf16.mxu0 0
      %271 = vmatpush1.bf16.msra.mxu0 %v268
      %272 = vmatprep.subr.bf16.mxu0 0
      %273 = vmatpush1.bf16.msra.mxu0 0
      %274 = vmatprep.subr.bf16.mxu0 0
      %275 = vmatpush1.bf16.msra.mxu0 0
      %276 = vmatprep.subr.bf16.mxu0 0
      %277 = vmatpush1.bf16.msra.mxu0 0
      %278 = vmatprep.subr.bf16.mxu0 0
      %279 = vmatpush1.bf16.msra.mxu0 0
      %280 = vmatprep.subr.bf16.mxu0 0
      %281 = vmatpush1.bf16.msra.mxu0 0
      %282 = vmatprep.subr.bf16.mxu0 0
      %283 = vmatpush1.bf16.msra.mxu0 0
      %284 = vmatprep.subr.bf16.mxu0 0
      %285 = vmatpush1.bf16.msra.mxu0 0
      %286 = vmatprep.subr.bf16.mxu0 0
      %287 = vmatpush1.bf16.msra.mxu0 0
      %288 = vmatprep.subr.bf16.mxu0 0
      %289 = vmatpush1.bf16.msra.mxu0 0
      %290 = vmatprep.subr.bf16.mxu0 0
      %291 = vmatpush1.bf16.msra.mxu0 0
      %292 = vmatprep.subr.bf16.mxu0 0
      %293 = vmatpush1.bf16.msra.mxu0 0
      %294 = vmatprep.subr.bf16.mxu0 0
      %295 = vmatpush1.bf16.msra.mxu0 0
      %296 = vmatprep.subr.bf16.mxu0 0
      %297 = vmatpush1.bf16.msra.mxu0 0
      %298 = vmatprep.subr.bf16.mxu0 0
      %299 = vmatpush1.bf16.msra.mxu0 0
      %300 = vmatprep.subr.bf16.mxu0 0
      %301 = vmatpush1.bf16.msra.mxu0 0
      %302 = vmatprep.mubr.bf16.mxu0 0
      %303 = vmatmul.mubr.bf16.gmra.mrb[0].mxu0 %v265
      %v304 = vpop.f32.mrb[0].mxu0
      %v305 = vadd.f32 0.0, %v304
      %v306 = vpop.f32.mrb[0].mxu0
      %v307 = vpop.f32.mrb[0].mxu0
      %v308 = vadd.f32 0.0, %v307
      %v309 = vpop.f32.mrb[0].mxu0
      %310 = vdwg.mxu0
      %v315 = vunpack.c.l.b16 %v252
      %v316 = vunpack.c.l.b16 %v253
      %v317 = vunpack.c.l.b16 %v254
      %v318 = vunpack.c.l.b16 %v255
      %v319 = vpack.c.b16 %v316, %v315
      %v320 = vpack.c.b16 %v318, %v317
      %v323 = vsel %vm156, %v251, 0
      %325 = vmatprep.subr.bf16.mxu0 0
      %326 = vmatpush1.bf16.msra.mxu0 %v319
      %327 = vmatprep.subr.bf16.mxu0 0
      %328 = vmatpush1.bf16.msra.mxu0 %v320
      %329 = vmatprep.subr.bf16.mxu0 0
      %330 = vmatpush1.bf16.msra.mxu0 0
      %331 = vmatprep.subr.bf16.mxu0 0
      %332 = vmatpush1.bf16.msra.mxu0 0
      %333 = vmatprep.subr.bf16.mxu0 0
      %334 = vmatpush1.bf16.msra.mxu0 0
      %335 = vmatprep.subr.bf16.mxu0 0
      %336 = vmatpush1.bf16.msra.mxu0 0
      %337 = vmatprep.subr.bf16.mxu0 0
      %338 = vmatpush1.bf16.msra.mxu0 0
      %339 = vmatprep.subr.bf16.mxu0 0
      %340 = vmatpush1.bf16.msra.mxu0 0
      %341 = vmatprep.subr.bf16.mxu0 0
      %342 = vmatpush1.bf16.msra.mxu0 0
      %343 = vmatprep.subr.bf16.mxu0 0
      %344 = vmatpush1.bf16.msra.mxu0 0
      %345 = vmatprep.subr.bf16.mxu0 0
      %346 = vmatpush1.bf16.msra.mxu0 0
      %347 = vmatprep.subr.bf16.mxu0 0
      %348 = vmatpush1.bf16.msra.mxu0 0
      %349 = vmatprep.subr.bf16.mxu0 0
      %350 = vmatpush1.bf16.msra.mxu0 0
      %351 = vmatprep.subr.bf16.mxu0 0
      %352 = vmatpush1.bf16.msra.mxu0 0
      %353 = vmatprep.subr.bf16.mxu0 0
      %354 = vmatpush1.bf16.msra.mxu0 0
      %355 = vmatprep.subr.bf16.mxu0 0
      %356 = vmatpush1.bf16.msra.mxu0 0
      %357 = vmatprep.mubr.bf16.mxu0 0
      %358 = vmatmul.mubr.bf16.gmra.mrb[0].mxu0 %v323
      %v359 = vpop.f32.mrb[0].mxu0
      %v360 = vadd.f32 %v305, %v359
      %v361 = vpop.f32.mrb[0].mxu0
      %v362 = vpop.f32.mrb[0].mxu0
      %v363 = vadd.f32 %v308, %v362
      %v364 = vpop.f32.mrb[0].mxu0
      %365 = vdwg.mxu0
      %v366 = vld [vmem:[%s4] sm:$0x1]
      %v368 = vlaneseq
      %v369 = vshrl.u32 %v368, 7
      %v370 = vsub.s32 0, %v369
      %v371 = vrot.slane %v366, %v370
      %v373 = vadd.f32 %v360, %v371
      %v374 = vadd.f32 %v363, %v371
      %v375 = vmax.f32 %v373, 0.0
      %v376 = vmax.f32 %v374, 0.0
      %377 = vst.msk [vmem:[#allocation3] sm:$0xff] %vm109, %v375
      %378 = vst.msk [vmem:[#allocation3 + $0x8] sm:$0xff] %vm109, %v376
    $region41: #{tpu_custom_call.1} parent=1 // pred_fallthru
      _
    // Predicated region
    $region42: #{tpu_custom_call.1} parent=1 // pred_check
      _
    $region43: #{tpu_custom_call.1} parent=1 // pred_check_branch
      %380 = sbr.rel (0) target = $region45
    $region44: #{tpu_custom_call.1} parent=1 // pred_region
      %s382 = ssub.s32 256, 256
      %383 = vsyncadd [#allocation4], %s382
      %s384 = sshll.u32 [#allocation3], 4
      %s385 = int_to_ptr.vmem [resolvable:$true] %s384
      %390 = dma.vmem_to_hbm [thread:$0]  %s385, 256, %s8, [#allocation4], 128, 128, 8
    $region45: #{tpu_custom_call.1} parent=1 // pred_fallthru
      _
    // Predicated region
    $region46: #{tpu_custom_call.1} parent=1 // pred_check
      _
    $region47: #{tpu_custom_call.1} parent=1 // pred_check_branch
      %392 = sbr.rel (0) target = $region49
    $region48: #{tpu_custom_call.1} parent=1 // pred_region
      %393 = dma.done [#allocation4], 256
    $region49: #{tpu_custom_call.1} parent=1 // pred_fallthru
      _
    %394 = vsyncpa [#allocation4], 1

</llo_original>
